<compile_context>
chip_gen: v6e
topology: v6e:2x2x1
jax: 0.10.0
libtpu: 0.0.40
codegen_flags: <defaults>
</compile_context>

<pallas_src>
import functools
import math

import jax
import jax.numpy as jnp
from jax import lax
from jax.experimental import pallas as pl
from jax.experimental.pallas import tpu as pltpu


def _selective_linear_kernel(xt_ref, w_ref, b_ref, vals_ref, idx_ref, *, top_k):
    # y^T = W @ x^T + b  -> (out_features, tm): features on sublanes,
    # batch on lanes.  MXU matmul with f32 accumulation.
    y = jnp.dot(w_ref[...], xt_ref[...], preferred_element_type=jnp.float32)
    y = y + b_ref[...]                      # (out_f, 1) broadcast over lanes

    out_f, tm = y.shape
    # Single sublane iota reused by every top-k pass.
    ids = lax.broadcasted_iota(jnp.int32, (out_f, tm), 0)
    big = jnp.int32(out_f)

    val_rows = []
    idx_rows = []
    cur = y
    for k in range(top_k):
        mk = jnp.max(cur, axis=0, keepdims=True)                       # (1, tm)
        # argmax with lowest-index tie-break (torch.topk semantics).
        ik = jnp.min(jnp.where(cur == mk, ids, big), axis=0, keepdims=True)
        val_rows.append(mk)
        idx_rows.append(ik)
        if k + 1 < top_k:
            # Knock out only the selected index; a duplicated max value may
            # still be picked as the next entry, exactly like torch.topk.
            cur = jnp.where(ids == ik, -jnp.inf, cur)

    # Single full-block, lane-dense stores (no masked partial writes).
    vals_ref[...] = jnp.concatenate(val_rows, axis=0).astype(vals_ref.dtype)
    idx_ref[...] = jnp.concatenate(idx_rows, axis=0).astype(idx_ref.dtype)


def selective_linear(x, weight, bias=None, *, top_k: int = 2, block_b: int = 256):
    """SelectiveLinear forward (default path).

    x:      (B, in_features) float32
    weight: (out_features, in_features)  -- native PyTorch layout, NOT transposed
    bias:   (out_features,) or None
    Returns (values (B, top_k) float32, indices (B, top_k) int32).
    PyTorch returns int64 indices; int32 is used on TPU (cast at the boundary
    if downstream code needs int64).  Inputs are assumed finite (NaNs differ
    from torch.topk behavior).
    """
    B, in_f = x.shape
    out_f, in_f_w = weight.shape
    assert in_f == in_f_w
    assert top_k > 0

    if bias is None:
        bias = jnp.zeros((out_f,), x.dtype)

    # ---- batch tiling: large, lane-aligned tiles ----
    if B <= block_b:
        tm = B                                    # one block = whole batch
        b_pad = B
    else:
        tm = max(128, (block_b // 128) * 128)     # lane-dense output blocks
        b_pad = ((B + tm - 1) // tm) * tm

    # ---- wrapper-side layout plumbing (cheap vs. the kernel itself) ----
    # Batch on lanes: x^T is (in_features, B_pad); weight stays untransposed.
    x_t = jnp.transpose(x)                        # (in_f, B)
    if b_pad != B:
        x_t = jnp.pad(x_t, ((0, 0), (0, b_pad - B)))
    b2 = bias.reshape(out_f, 1)

    grid = (b_pad // tm,)

    cost = pl.CostEstimate(
        flops=2 * b_pad * in_f * out_f,
        transcendentals=0,
        bytes_accessed=4 * (b_pad * in_f + out_f * in_f + out_f
                            + 2 * top_k * b_pad),
    )
    # Rough VMEM need (double-buffered ins/outs + y^T temporaries) with
    # headroom; clamped so the limit is valid on every TPU generation.
    vmem_est = 4 * (2 * in_f * tm + 2 * out_f * in_f + 2 * out_f
                    + 4 * top_k * tm + 4 * out_f * tm)
    vmem_limit = int(min(max(2 * vmem_est, 32 * 1024 * 1024), 64 * 1024 * 1024))

    kernel = functools.partial(_selective_linear_kernel, top_k=top_k)

    vals_t, idx_t = pl.pallas_call(
        kernel,
        out_shape=(
            jax.ShapeDtypeStruct((top_k, b_pad), jnp.float32),
            jax.ShapeDtypeStruct((top_k, b_pad), jnp.int32),
        ),
        grid_spec=pltpu.PrefetchScalarGridSpec(
            num_scalar_prefetch=0,
            grid=grid,
            in_specs=[
                pl.BlockSpec((in_f, tm), lambda i: (0, i)),      # x^T tile
                pl.BlockSpec((out_f, in_f), lambda i: (0, 0)),   # W (resident)
                pl.BlockSpec((out_f, 1), lambda i: (0, 0)),      # bias (resident)
            ],
            out_specs=(
                pl.BlockSpec((top_k, tm), lambda i: (0, i)),     # values^T
                pl.BlockSpec((top_k, tm), lambda i: (0, i)),     # indices^T
            ),
        ),
        compiler_params=pltpu.CompilerParams(
            dimension_semantics=("parallel",),
            vmem_limit_bytes=vmem_limit,
        ),
        cost_estimate=cost,
    )(x_t, weight, b2)

    # Back to the PyTorch (B, top_k) layout; drop batch padding.
    vals = jnp.transpose(vals_t[:, :B])
    idx = jnp.transpose(idx_t[:, :B])
    return vals, idx


def _reference(x, weight, bias, top_k):
    y = x @ weight.T + bias
    return lax.top_k(y, top_k)


if __name__ == "__main__":
    in_f, out_f, top_k = 32, 64, 2
    key = jax.random.PRNGKey(0)
    kx1, kx2, kw, kb = jax.random.split(key, 4)

    # Deterministic init mirroring reset_parameters():
    #   kaiming_uniform_(a=sqrt(5)) on (out, in) => U(-1/sqrt(fan_in), +1/sqrt(fan_in))
    #   bias ~ U(-1/sqrt(fan_in), +1/sqrt(fan_in))
    bound = 1.0 / math.sqrt(in_f)
    weight = jax.random.uniform(kw, (out_f, in_f), jnp.float32, -bound, bound)
    bias = jax.random.uniform(kb, (out_f,), jnp.float32, -bound, bound)

    # 1) Single lane-dense block (tm == B == 256).
    x1 = jax.random.normal(kx1, (256, in_f), dtype=jnp.float32)
    v1, i1 = selective_linear(x1, weight, bias, top_k=top_k)
    jax.block_until_ready((v1, i1))
    rv1, ri1 = _reference(x1, weight, bias, top_k)
    assert v1.shape == (256, top_k) and i1.shape == (256, top_k)
    assert jnp.allclose(v1, rv1, atol=1e-5, rtol=1e-5)
    assert jnp.array_equal(i1, ri1.astype(jnp.int32))

    # 2) Ragged batch exercising the multi-step grid + zero-padding path.
    x2 = jax.random.normal(kx2, (200, in_f), dtype=jnp.float32)
    v2, i2 = selective_linear(x2, weight, bias, top_k=top_k, block_b=128)
    jax.block_until_ready((v2, i2))
    rv2, ri2 = _reference(x2, weight, bias, top_k)
    assert v2.shape == (200, top_k) and i2.shape == (200, top_k)
    assert jnp.allclose(v2, rv2, atol=1e-5, rtol=1e-5)
    assert jnp.array_equal(i2, ri2.astype(jnp.int32))

    print("KERNEL_OK")
</pallas_src>

<mosaic_0001>
module attributes {stable_mosaic.version = 11 : i64} {
  func.func @_selective_linear_kernel(%arg0: i32, %arg1: memref<32x256xf32, #tpu.memory_space<vmem>>, %arg2: memref<64x32xf32, #tpu.memory_space<vmem>>, %arg3: memref<64x1xf32, #tpu.memory_space<vmem>>, %arg4: memref<2x256xf32, #tpu.memory_space<vmem>>, %arg5: memref<2x256xi32, #tpu.memory_space<vmem>>) attributes {dimension_semantics = [#tpu.dimension_semantics<parallel>], iteration_bounds = array<i64: 1>, scalar_prefetch = 0 : i64, scratch_operands = 0 : i64, tpu.core_type = #tpu.core_type<tc>, window_params = [{transform_indices = @transform_0, window_bounds = array<i64: 32, 256>}, {pipeline_mode = #tpu.pipeline_mode<synchronous>, transform_indices = @transform_1, window_bounds = array<i64: 64, 32>}, {pipeline_mode = #tpu.pipeline_mode<synchronous>, transform_indices = @transform_2, window_bounds = array<i64: 64, 1>}, {transform_indices = @transform_3, window_bounds = array<i64: 2, 256>}, {transform_indices = @transform_4, window_bounds = array<i64: 2, 256>}]} {
    %c0 = arith.constant 0 : index
    %c0_0 = arith.constant 0 : index
    %0 = vector.load %arg2[%c0, %c0_0] : memref<64x32xf32, #tpu.memory_space<vmem>>, vector<64x32xf32>
    %c0_1 = arith.constant 0 : index
    %c0_2 = arith.constant 0 : index
    %1 = vector.load %arg1[%c0_1, %c0_2] : memref<32x256xf32, #tpu.memory_space<vmem>>, vector<32x256xf32>
    %cst = arith.constant dense<0.000000e+00> : vector<64x256xf32>
    %2 = tpu.matmul %0, %1, %cst {dimension_numbers = #tpu.dot_dimension_numbers<[1], [0], [0], [1], [0, 0, 1, 1], [], []>} : vector<64x32xf32>, vector<32x256xf32>, vector<64x256xf32> -> vector<64x256xf32>
    %c0_3 = arith.constant 0 : index
    %c0_4 = arith.constant 0 : index
    %3 = vector.load %arg3[%c0_3, %c0_4] : memref<64x1xf32, #tpu.memory_space<vmem>>, vector<64x1xf32>
    %4 = vector.broadcast %3 : vector<64x1xf32> to vector<64x256xf32>
    %5 = arith.addf %2, %4 : vector<64x256xf32>
    %6 = tpu.iota {dimensions = array<i32: 0>} : vector<64x256xi32>
    %cst_5 = arith.constant dense<0xFF800000> : vector<256xf32>
    %7 = vector.multi_reduction <maximumf>, %5, %cst_5 [0] : vector<64x256xf32> to vector<256xf32>
    %8 = vector.shape_cast %7 : vector<256xf32> to vector<1x256xf32>
    %9 = vector.broadcast %8 : vector<1x256xf32> to vector<64x256xf32>
    %10 = arith.cmpf oeq, %5, %9 : vector<64x256xf32>
    %c64_i32 = arith.constant 64 : i32
    %11 = vector.broadcast %c64_i32 : i32 to vector<64x256xi32>
    %12 = arith.select %10, %6, %11 : vector<64x256xi1>, vector<64x256xi32>
    %cst_6 = arith.constant dense<2147483647> : vector<256xi32>
    %13 = vector.multi_reduction <minsi>, %12, %cst_6 [0] : vector<64x256xi32> to vector<256xi32>
    %14 = vector.shape_cast %13 : vector<256xi32> to vector<1x256xi32>
    %15 = vector.broadcast %14 : vector<1x256xi32> to vector<64x256xi32>
    %16 = arith.cmpi eq, %6, %15 : vector<64x256xi32>
    %cst_7 = arith.constant 0xFF800000 : f32
    %17 = vector.broadcast %cst_7 : f32 to vector<64x256xf32>
    %18 = arith.select %16, %17, %5 : vector<64x256xi1>, vector<64x256xf32>
    %cst_8 = arith.constant dense<0xFF800000> : vector<256xf32>
    %19 = vector.multi_reduction <maximumf>, %18, %cst_8 [0] : vector<64x256xf32> to vector<256xf32>
    %20 = vector.shape_cast %19 : vector<256xf32> to vector<1x256xf32>
    %21 = vector.broadcast %20 : vector<1x256xf32> to vector<64x256xf32>
    %22 = arith.cmpf oeq, %18, %21 : vector<64x256xf32>
    %c64_i32_9 = arith.constant 64 : i32
    %23 = vector.broadcast %c64_i32_9 : i32 to vector<64x256xi32>
    %24 = arith.select %22, %6, %23 : vector<64x256xi1>, vector<64x256xi32>
    %cst_10 = arith.constant dense<2147483647> : vector<256xi32>
    %25 = vector.multi_reduction <minsi>, %24, %cst_10 [0] : vector<64x256xi32> to vector<256xi32>
    %26 = vector.shape_cast %25 : vector<256xi32> to vector<1x256xi32>
    %27 = tpu.concatenate %8, %20 in 0 : vector<1x256xf32>, vector<1x256xf32> -> vector<2x256xf32>
    %c0_11 = arith.constant 0 : index
    %c0_12 = arith.constant 0 : index
    %28 = vector.load %arg4[%c0_11, %c0_12] : memref<2x256xf32, #tpu.memory_space<vmem>>, vector<2x256xf32>
    tpu.vector_store %arg4[%c0_11, %c0_12], %27 {strides = array<i32>} : memref<2x256xf32, #tpu.memory_space<vmem>>, vector<2x256xf32>,
    %29 = tpu.concatenate %14, %26 in 0 : vector<1x256xi32>, vector<1x256xi32> -> vector<2x256xi32>
    %c0_13 = arith.constant 0 : index
    %c0_14 = arith.constant 0 : index
    %30 = vector.load %arg5[%c0_13, %c0_14] : memref<2x256xi32, #tpu.memory_space<vmem>>, vector<2x256xi32>
    tpu.vector_store %arg5[%c0_13, %c0_14], %29 {strides = array<i32>} : memref<2x256xi32, #tpu.memory_space<vmem>>, vector<2x256xi32>,
    return
  }
  func.func @transform_0(%arg0: i32) -> (i32, i32) {
    %c0_i32 = arith.constant 0 : i32
    %c0_i32_0 = arith.constant 0 : i32
    return %c0_i32, %arg0 : i32, i32
  }
  func.func @transform_1(%arg0: i32) -> (i32, i32) {
    %c0_i32 = arith.constant 0 : i32
    %c0_i32_0 = arith.constant 0 : i32
    %c0_i32_1 = arith.constant 0 : i32
    return %c0_i32, %c0_i32_0 : i32, i32
  }
  func.func @transform_2(%arg0: i32) -> (i32, i32) {
    %c0_i32 = arith.constant 0 : i32
    %c0_i32_0 = arith.constant 0 : i32
    %c0_i32_1 = arith.constant 0 : i32
    return %c0_i32, %c0_i32_0 : i32, i32
  }
  func.func @transform_3(%arg0: i32) -> (i32, i32) {
    %c0_i32 = arith.constant 0 : i32
    %c0_i32_0 = arith.constant 0 : i32
    return %c0_i32, %arg0 : i32, i32
  }
  func.func @transform_4(%arg0: i32) -> (i32, i32) {
    %c0_i32 = arith.constant 0 : i32
    %c0_i32_0 = arith.constant 0 : i32
    return %c0_i32, %arg0 : i32, i32
  }
}

</mosaic_0001>

<llo_original>
// kernel: tpu_custom_call.1
$region0: #{tpu_custom_call.1}
  #allocation0 [shape = 'u32[]', space=smem, size = 0x4, offset = 0x4, fixed_abs, tag = 'smem constant byte address 0x4 - core index']
  #allocation1 [shape = 'u32[144,128]{1,0:T(1,128)}', space=vmem, size = 0x12000, scoped, tag = 'internal scratch']
  %s0 = inlined_call_operand.vmem [shape: f32[32,256], index: 0, kind: input, shape index: {}]
  %s1 = inlined_call_operand.vmem [shape: f32[64,32], index: 1, kind: input, shape index: {}]
  %s2 = inlined_call_operand.vmem [shape: f32[64,1], index: 2, kind: input, shape index: {}]
  %s3 = inlined_call_operand.hbm [shape: f32[2,256], index: 3, kind: output, shape index: {0}]
  %s4 = inlined_call_operand.hbm [shape: s32[2,256], index: 4, kind: output, shape index: {1}]
  %5 = xla_tuple %s3, %s4
  %s6 = sld [smem:[#allocation0]]
  $region30: #{tpu_custom_call.1} parent=0
    _
  %s8 = ssub.s32 1, %s6
  %s9 = scalar_select 0, %s8, %s6
  $region1: #{tpu_custom_call.1} parent=0
    #allocation2 [shape = 'u8[2048]{0}', space=vmem, size = 0x800, scoped, tag = 'output window, operand 0, single buffered']
    #allocation3 [shape = 's32[1]{0}', space=sflag, size = 0x4, scoped, tag = 'scoped memory for tpu_custom_call.1']
    #allocation4 [shape = 'u8[2048]{0}', space=vmem, size = 0x800, scoped, tag = 'output window, operand 1, single buffered']
    #allocation5 [shape = 's32[1]{0}', space=sflag, size = 0x4, scoped, tag = 'scoped memory for tpu_custom_call.1']
    %10 = vsyncpa [#allocation3], 0
    %11 = vsyncpa [#allocation5], 0
    // Predicated region
    $region2: #{tpu_custom_call.1} parent=1 // pred_check
      _
    $region3: #{tpu_custom_call.1} parent=1 // pred_check_branch
      %13 = sbr.rel (0) target = $region5
    $region4: #{tpu_custom_call.1} parent=1 // pred_region
      _
    $region5: #{tpu_custom_call.1} parent=1 // pred_fallthru
      _
    // Predicated region
    $region6: #{tpu_custom_call.1} parent=1 // pred_check
      _
    $region7: #{tpu_custom_call.1} parent=1 // pred_check_branch
      %15 = sbr.rel (0) target = $region9
    $region8: #{tpu_custom_call.1} parent=1 // pred_region
      _
    $region9: #{tpu_custom_call.1} parent=1 // pred_fallthru
      _
    // Predicated region
    $region10: #{tpu_custom_call.1} parent=1 // pred_check
      _
    $region11: #{tpu_custom_call.1} parent=1 // pred_check_branch
      %17 = sbr.rel (0) target = $region13
    $region12: #{tpu_custom_call.1} parent=1 // pred_region
      _
    $region13: #{tpu_custom_call.1} parent=1 // pred_fallthru
      _
    %v18 = vld [vmem:[%s1] sm:$0xff]
    %v19 = vld [vmem:[%s1 + $0x8] sm:$0xff]
    %v20 = vld [vmem:[%s1 + $0x10] sm:$0xff]
    %v21 = vld [vmem:[%s1 + $0x18] sm:$0xff]
    %v22 = vld [vmem:[%s1 + $0x20] sm:$0xff]
    %v23 = vld [vmem:[%s1 + $0x28] sm:$0xff]
    %v24 = vld [vmem:[%s1 + $0x30] sm:$0xff]
    %v25 = vld [vmem:[%s1 + $0x38] sm:$0xff]
    %v26 = vld [vmem:[%s0] sm:$0xff]
    %v27 = vld [vmem:[%s0 + $0x8] sm:$0xff]
    %v28 = vld [vmem:[%s0 + $0x10] sm:$0xff]
    %v29 = vld [vmem:[%s0 + $0x18] sm:$0xff]
    %v30 = vld [vmem:[%s0 + $0x20] sm:$0xff]
    %v31 = vld [vmem:[%s0 + $0x28] sm:$0xff]
    %v32 = vld [vmem:[%s0 + $0x30] sm:$0xff]
    %v33 = vld [vmem:[%s0 + $0x38] sm:$0xff]
    %v34 = vld [vmem:[%s2] sm:$0xff]
    %v35 = vld [vmem:[%s2 + $0x8] sm:$0xff]
    %v36 = vld [vmem:[%s2 + $0x10] sm:$0xff]
    %v37 = vld [vmem:[%s2 + $0x18] sm:$0xff]
    %v38 = vld [vmem:[%s2 + $0x20] sm:$0xff]
    %v39 = vld [vmem:[%s2 + $0x28] sm:$0xff]
    %v40 = vld [vmem:[%s2 + $0x30] sm:$0xff]
    %v41 = vld [vmem:[%s2 + $0x38] sm:$0xff]
    %43 = vset.pattern.permute.xlu0 0
    %44 = vperm.xlu0 %43, %v34
    %v45 = vpop.permute.xlu0 %44
    %48 = vset.pattern.permute.xlu0 0
    %49 = vperm.xlu0 %48, %v35
    %v50 = vpop.permute.xlu0 %49
    %53 = vset.pattern.permute.xlu0 0
    %54 = vperm.xlu0 %53, %v36
    %v55 = vpop.permute.xlu0 %54
    %58 = vset.pattern.permute.xlu0 0
    %59 = vperm.xlu0 %58, %v37
    %v60 = vpop.permute.xlu0 %59
    %63 = vset.pattern.permute.xlu0 0
    %64 = vperm.xlu0 %63, %v38
    %v65 = vpop.permute.xlu0 %64
    %68 = vset.pattern.permute.xlu0 0
    %69 = vperm.xlu0 %68, %v39
    %v70 = vpop.permute.xlu0 %69
    %73 = vset.pattern.permute.xlu0 0
    %74 = vperm.xlu0 %73, %v40
    %v75 = vpop.permute.xlu0 %74
    %78 = vset.pattern.permute.xlu0 0
    %79 = vperm.xlu0 %78, %v41
    %v80 = vpop.permute.xlu0 %79
    %vm82 = vcmask 261120
    %v84 = vsel %vm82, %v18, 0
    %v87 = vsel %vm82, %v19, 0
    %v90 = vsel %vm82, %v20, 0
    %v93 = vsel %vm82, %v21, 0
    %v96 = vsel %vm82, %v22, 0
    %v99 = vsel %vm82, %v23, 0
    %v102 = vsel %vm82, %v24, 0
    %v105 = vsel %vm82, %v25, 0
    %107 = vmatprep.subr.mxu0 0.0
    %108 = vmatpush1.msra.mxu0 0.0
    %109 = vmatprep.subr.mxu0 0.0
    %110 = vmatpush1.msra.mxu0 0.0
    %111 = vmatprep.subr.mxu0 0.0
    %112 = vmatpush1.msra.mxu0 0.0
    %113 = vmatprep.subr.mxu0 0.0
    %114 = vmatpush1.msra.mxu0 0.0
    %115 = vmatprep.subr.mxu0 0.0
    %116 = vmatpush1.msra.mxu0 0.0
    %117 = vmatprep.subr.mxu0 0.0
    %118 = vmatpush1.msra.mxu0 0.0
    %119 = vmatprep.subr.mxu0 0.0
    %120 = vmatpush1.msra.mxu0 0.0
    %121 = vmatprep.subr.mxu0 0.0
    %122 = vmatpush1.msra.mxu0 0.0
    %123 = vmatprep.subr.mxu0 0.0
    %124 = vmatpush1.msra.mxu0 0.0
    %125 = vmatprep.subr.mxu0 0.0
    %126 = vmatpush1.msra.mxu0 0.0
    %127 = vmatprep.subr.mxu0 0.0
    %128 = vmatpush1.msra.mxu0 0.0
    %129 = vmatprep.subr.mxu0 0.0
    %130 = vmatpush1.msra.mxu0 0.0
    %131 = vmatprep.subr.mxu0 %v33
    %132 = vmatpush1.msra.mxu0 %v32
    %133 = vmatprep.subr.mxu0 %v31
    %134 = vmatpush1.msra.mxu0 %v30
    %135 = vmatprep.subr.mxu0 %v29
    %136 = vmatpush1.msra.mxu0 %v28
    %137 = vmatprep.subr.mxu0 %v27
    %138 = vmatpush1.msra.mxu0 %v26
    %139 = vmatprep.subr.mxu0 0.0
    %140 = vmatpush2.msra.mxu0 0.0
    %141 = vmatprep.subr.mxu0 0.0
    %142 = vmatpush2.msra.mxu0 0.0
    %143 = vmatprep.subr.mxu0 0.0
    %144 = vmatpush2.msra.mxu0 0.0
    %145 = vmatprep.subr.mxu0 0.0
    %146 = vmatpush2.msra.mxu0 0.0
    %147 = vmatprep.subr.mxu0 0.0
    %148 = vmatpush2.msra.mxu0 0.0
    %149 = vmatprep.subr.mxu0 0.0
    %150 = vmatpush2.msra.mxu0 0.0
    %151 = vmatprep.subr.mxu0 0.0
    %152 = vmatpush2.msra.mxu0 0.0
    %153 = vmatprep.subr.mxu0 0.0
    %154 = vmatpush2.msra.mxu0 0.0
    %155 = vmatprep.subr.mxu0 0.0
    %156 = vmatpush2.msra.mxu0 0.0
    %157 = vmatprep.subr.mxu0 0.0
    %158 = vmatpush2.msra.mxu0 0.0
    %159 = vmatprep.subr.mxu0 0.0
    %160 = vmatpush2.msra.mxu0 0.0
    %161 = vmatprep.subr.mxu0 0.0
    %162 = vmatpush2.msra.mxu0 0.0
    %163 = vmatprep.subr.mxu0 0.0
    %164 = vmatpush2.msra.mxu0 0.0
    %165 = vmatprep.subr.mxu0 0.0
    %166 = vmatpush2.msra.mxu0 0.0
    %167 = vmatprep.subr.mxu0 0.0
    %168 = vmatpush2.msra.mxu0 0.0
    %169 = vmatprep.subr.mxu0 0.0
    %170 = vmatpush2.msra.mxu0 0.0
    %171 = vmatprep.mubr.f32.mxu0 0.0
    %172 = vmatmul.mubr.f32.gmra.mxu0 %v84
    %v173 = vpop.f32.mrf.mxu0
    %v174 = vadd.f32 %v45, %v173
    %v175 = vpop.f32.mrf.mxu0
    %v176 = vadd.f32 %v45, %v175
    %177 = vmatprep.mubr.f32.mxu0 0.0
    %178 = vmatmul.mubr.f32.gmra.mxu0 %v87
    %v179 = vpop.f32.mrf.mxu0
    %v180 = vadd.f32 %v50, %v179
    %v181 = vpop.f32.mrf.mxu0
    %v182 = vadd.f32 %v50, %v181
    %183 = vmatprep.mubr.f32.mxu0 0.0
    %184 = vmatmul.mubr.f32.gmra.mxu0 %v90
    %v185 = vpop.f32.mrf.mxu0
    %v186 = vadd.f32 %v55, %v185
    %v187 = vpop.f32.mrf.mxu0
    %v188 = vadd.f32 %v55, %v187
    %189 = vmatprep.mubr.f32.mxu0 0.0
    %190 = vmatmul.mubr.f32.gmra.mxu0 %v93
    %v191 = vpop.f32.mrf.mxu0
    %v192 = vadd.f32 %v60, %v191
    %v193 = vpop.f32.mrf.mxu0
    %v194 = vadd.f32 %v60, %v193
    %195 = vmatprep.mubr.f32.mxu0 0.0
    %196 = vmatmul.mubr.f32.gmra.mxu0 %v96
    %v197 = vpop.f32.mrf.mxu0
    %v198 = vadd.f32 %v65, %v197
    %v199 = vpop.f32.mrf.mxu0
    %v200 = vadd.f32 %v65, %v199
    %201 = vmatprep.mubr.f32.mxu0 0.0
    %202 = vmatmul.mubr.f32.gmra.mxu0 %v99
    %v203 = vpop.f32.mrf.mxu0
    %v204 = vadd.f32 %v70, %v203
    %v205 = vpop.f32.mrf.mxu0
    %v206 = vadd.f32 %v70, %v205
    %207 = vmatprep.mubr.f32.mxu0 0.0
    %208 = vmatmul.mubr.f32.gmra.mxu0 %v102
    %v209 = vpop.f32.mrf.mxu0
    %v210 = vadd.f32 %v75, %v209
    %v211 = vpop.f32.mrf.mxu0
    %v212 = vadd.f32 %v75, %v211
    %213 = vmatprep.mubr.f32.mxu0 0.0
    %214 = vmatmul.mubr.f32.gmra.mxu0 %v105
    %v215 = vpop.f32.mrf.mxu0
    %v216 = vadd.f32 %v80, %v215
    %v217 = vpop.f32.mrf.mxu0
    %v218 = vadd.f32 %v80, %v217
    %219 = vdwg.mxu0
    %v220 = vlaneseq
    %v221 = vshrl.u32 %v220, 7
    %v222 = vadd.s32 %v221, 8
    %v223 = vadd.s32 %v221, 16
    %v224 = vadd.s32 %v221, 24
    %v225 = vadd.s32 %v221, 32
    %v226 = vadd.s32 %v221, 40
    %v227 = vadd.s32 %v221, 48
    %v228 = vadd.s32 %v221, 56
    %v229 = vmax.f32 %v174, %v186
    %v230 = vmax.f32 %v180, %v192
    %v231 = vmax.f32 %v229, %v198
    %v232 = vmax.f32 %v230, %v204
    %v233 = vmax.f32 %v231, %v210
    %v234 = vmax.f32 %v232, %v216
    %v235 = vmax.f32 %v233, %v234
    %v236 = vrot.slane %v235, 4
    %v237 = vmax.f32 %v235, %v236
    %v238 = vrot.slane %v237, 2
    %v239 = vmax.f32 %v237, %v238
    %v240 = vrot.slane %v239, 1
    %v241 = vmax.f32 %v239, %v240
    %v242 = vmax.f32 %v176, %v188
    %v243 = vmax.f32 %v182, %v194
    %v244 = vmax.f32 %v242, %v200
    %v245 = vmax.f32 %v243, %v206
    %v246 = vmax.f32 %v244, %v212
    %v247 = vmax.f32 %v245, %v218
    %v248 = vmax.f32 %v246, %v247
    %v249 = vrot.slane %v248, 4
    %v250 = vmax.f32 %v248, %v249
    %v251 = vrot.slane %v250, 2
    %v252 = vmax.f32 %v250, %v251
    %v253 = vrot.slane %v252, 1
    %v254 = vmax.f32 %v252, %v253
    %vm255 = vcmp.eq.f32.partialorder %v174, %v241
    %vm256 = vcmp.eq.f32.partialorder %v176, %v254
    %vm257 = vcmp.eq.f32.partialorder %v180, %v241
    %vm258 = vcmp.eq.f32.partialorder %v182, %v254
    %vm259 = vcmp.eq.f32.partialorder %v186, %v241
    %vm260 = vcmp.eq.f32.partialorder %v188, %v254
    %vm261 = vcmp.eq.f32.partialorder %v192, %v241
    %vm262 = vcmp.eq.f32.partialorder %v194, %v254
    %vm263 = vcmp.eq.f32.partialorder %v198, %v241
    %vm264 = vcmp.eq.f32.partialorder %v200, %v254
    %vm265 = vcmp.eq.f32.partialorder %v204, %v241
    %vm266 = vcmp.eq.f32.partialorder %v206, %v254
    %vm267 = vcmp.eq.f32.partialorder %v210, %v241
    %vm268 = vcmp.eq.f32.partialorder %v212, %v254
    %vm269 = vcmp.eq.f32.partialorder %v216, %v241
    %vm270 = vcmp.eq.f32.partialorder %v218, %v254
    %v271 = vsel %vm255, %v221, 64
    %v272 = vsel %vm256, %v221, 64
    %v273 = vsel %vm257, %v222, 64
    %v274 = vsel %vm258, %v222, 64
    %v275 = vsel %vm259, %v223, 64
    %v276 = vsel %vm260, %v223, 64
    %v277 = vsel %vm261, %v224, 64
    %v278 = vsel %vm262, %v224, 64
    %v279 = vsel %vm263, %v225, 64
    %v280 = vsel %vm264, %v225, 64
    %v281 = vsel %vm265, %v226, 64
    %v282 = vsel %vm266, %v226, 64
    %v283 = vsel %vm267, %v227, 64
    %v284 = vsel %vm268, %v227, 64
    %v285 = vsel %vm269, %v228, 64
    %v286 = vsel %vm270, %v228, 64
    %vm287 = vcmp.lt.s32.totalorder %v271, %v275
    %v288 = vsel %vm287, %v271, %v275
    %vm289 = vcmp.lt.s32.totalorder %v273, %v277
    %v290 = vsel %vm289, %v273, %v277
    %vm291 = vcmp.lt.s32.totalorder %v288, %v279
    %v292 = vsel %vm291, %v288, %v279
    %vm293 = vcmp.lt.s32.totalorder %v290, %v281
    %v294 = vsel %vm293, %v290, %v281
    %vm295 = vcmp.lt.s32.totalorder %v292, %v283
    %v296 = vsel %vm295, %v292, %v283
    %vm297 = vcmp.lt.s32.totalorder %v294, %v285
    %v298 = vsel %vm297, %v294, %v285
    %vm299 = vcmp.lt.s32.totalorder %v296, %v298
    %v300 = vsel %vm299, %v296, %v298
    %v301 = vrot.slane %v300, 4
    %vm302 = vcmp.lt.s32.totalorder %v300, %v301
    %v303 = vsel %vm302, %v300, %v301
    %v304 = vrot.slane %v303, 2
    %vm305 = vcmp.lt.s32.totalorder %v303, %v304
    %v306 = vsel %vm305, %v303, %v304
    %v307 = vrot.slane %v306, 1
    %vm308 = vcmp.lt.s32.totalorder %v306, %v307
    %v309 = vsel %vm308, %v306, %v307
    %vm310 = vcmp.lt.s32.totalorder %v272, %v276
    %v311 = vsel %vm310, %v272, %v276
    %vm312 = vcmp.lt.s32.totalorder %v274, %v278
    %v313 = vsel %vm312, %v274, %v278
    %vm314 = vcmp.lt.s32.totalorder %v311, %v280
    %v315 = vsel %vm314, %v311, %v280
    %vm316 = vcmp.lt.s32.totalorder %v313, %v282
    %v317 = vsel %vm316, %v313, %v282
    %vm318 = vcmp.lt.s32.totalorder %v315, %v284
    %v319 = vsel %vm318, %v315, %v284
    %vm320 = vcmp.lt.s32.totalorder %v317, %v286
    %v321 = vsel %vm320, %v317, %v286
    %vm322 = vcmp.lt.s32.totalorder %v319, %v321
    %v323 = vsel %vm322, %v319, %v321
    %v324 = vrot.slane %v323, 4
    %vm325 = vcmp.lt.s32.totalorder %v323, %v324
    %v326 = vsel %vm325, %v323, %v324
    %v327 = vrot.slane %v326, 2
    %vm328 = vcmp.lt.s32.totalorder %v326, %v327
    %v329 = vsel %vm328, %v326, %v327
    %v330 = vrot.slane %v329, 1
    %vm331 = vcmp.lt.s32.totalorder %v329, %v330
    %v332 = vsel %vm331, %v329, %v330
    %vm333 = vcmp.eq.s32.totalorder %v221, %v309
    %vm334 = vcmp.eq.s32.totalorder %v221, %v332
    %vm335 = vcmp.eq.s32.totalorder %v222, %v309
    %vm336 = vcmp.eq.s32.totalorder %v222, %v332
    %vm337 = vcmp.eq.s32.totalorder %v223, %v309
    %vm338 = vcmp.eq.s32.totalorder %v223, %v332
    %vm339 = vcmp.eq.s32.totalorder %v224, %v309
    %vm340 = vcmp.eq.s32.totalorder %v224, %v332
    %vm341 = vcmp.eq.s32.totalorder %v225, %v309
    %vm342 = vcmp.eq.s32.totalorder %v225, %v332
    %vm343 = vcmp.eq.s32.totalorder %v226, %v309
    %vm344 = vcmp.eq.s32.totalorder %v226, %v332
    %vm345 = vcmp.eq.s32.totalorder %v227, %v309
    %vm346 = vcmp.eq.s32.totalorder %v227, %v332
    %vm347 = vcmp.eq.s32.totalorder %v228, %v309
    %vm348 = vcmp.eq.s32.totalorder %v228, %v332
    %v349 = vsel %vm333, -inf, %v174
    %v350 = vsel %vm334, -inf, %v176
    %v351 = vsel %vm335, -inf, %v180
    %v352 = vsel %vm336, -inf, %v182
    %v353 = vsel %vm337, -inf, %v186
    %v354 = vsel %vm338, -inf, %v188
    %v355 = vsel %vm339, -inf, %v192
    %v356 = vsel %vm340, -inf, %v194
    %v357 = vsel %vm341, -inf, %v198
    %v358 = vsel %vm342, -inf, %v200
    %v359 = vsel %vm343, -inf, %v204
    %v360 = vsel %vm344, -inf, %v206
    %v361 = vsel %vm345, -inf, %v210
    %v362 = vsel %vm346, -inf, %v212
    %v363 = vsel %vm347, -inf, %v216
    %v364 = vsel %vm348, -inf, %v218
    %v365 = vmax.f32 %v349, %v353
    %v366 = vmax.f32 %v351, %v355
    %v367 = vmax.f32 %v365, %v357
    %v368 = vmax.f32 %v366, %v359
    %v369 = vmax.f32 %v367, %v361
    %v370 = vmax.f32 %v368, %v363
    %v371 = vmax.f32 %v369, %v370
    %v372 = vrot.slane %v371, 4
    %v373 = vmax.f32 %v371, %v372
    %v374 = vrot.slane %v373, 2
    %v375 = vmax.f32 %v373, %v374
    %v376 = vrot.slane %v375, 1
    %v377 = vmax.f32 %v375, %v376
    %v378 = vmax.f32 %v350, %v354
    %v379 = vmax.f32 %v352, %v356
    %v380 = vmax.f32 %v378, %v358
    %v381 = vmax.f32 %v379, %v360
    %v382 = vmax.f32 %v380, %v362
    %v383 = vmax.f32 %v381, %v364
    %v384 = vmax.f32 %v382, %v383
    %v385 = vrot.slane %v384, 4
    %v386 = vmax.f32 %v384, %v385
    %v387 = vrot.slane %v386, 2
    %v388 = vmax.f32 %v386, %v387
    %v389 = vrot.slane %v388, 1
    %v390 = vmax.f32 %v388, %v389
    %vm391 = vcmp.eq.f32.partialorder %v349, %v377
    %vm392 = vcmp.eq.f32.partialorder %v350, %v390
    %vm393 = vcmp.eq.f32.partialorder %v351, %v377
    %vm394 = vcmp.eq.f32.partialorder %v352, %v390
    %vm395 = vcmp.eq.f32.partialorder %v353, %v377
    %vm396 = vcmp.eq.f32.partialorder %v354, %v390
    %vm397 = vcmp.eq.f32.partialorder %v355, %v377
    %vm398 = vcmp.eq.f32.partialorder %v356, %v390
    %vm399 = vcmp.eq.f32.partialorder %v357, %v377
    %vm400 = vcmp.eq.f32.partialorder %v358, %v390
    %vm401 = vcmp.eq.f32.partialorder %v359, %v377
    %vm402 = vcmp.eq.f32.partialorder %v360, %v390
    %vm403 = vcmp.eq.f32.partialorder %v361, %v377
    %vm404 = vcmp.eq.f32.partialorder %v362, %v390
    %vm405 = vcmp.eq.f32.partialorder %v363, %v377
    %vm406 = vcmp.eq.f32.partialorder %v364, %v390
    %v407 = vsel %vm391, %v221, 64
    %v408 = vsel %vm392, %v221, 64
    %v409 = vsel %vm393, %v222, 64
    %v410 = vsel %vm394, %v222, 64
    %v411 = vsel %vm395, %v223, 64
    %v412 = vsel %vm396, %v223, 64
    %v413 = vsel %vm397, %v224, 64
    %v414 = vsel %vm398, %v224, 64
    %v415 = vsel %vm399, %v225, 64
    %v416 = vsel %vm400, %v225, 64
    %v417 = vsel %vm401, %v226, 64
    %v418 = vsel %vm402, %v226, 64
    %v419 = vsel %vm403, %v227, 64
    %v420 = vsel %vm404, %v227, 64
    %v421 = vsel %vm405, %v228, 64
    %v422 = vsel %vm406, %v228, 64
    %vm423 = vcmp.lt.s32.totalorder %v407, %v411
    %v424 = vsel %vm423, %v407, %v411
    %vm425 = vcmp.lt.s32.totalorder %v409, %v413
    %v426 = vsel %vm425, %v409, %v413
    %vm427 = vcmp.lt.s32.totalorder %v424, %v415
    %v428 = vsel %vm427, %v424, %v415
    %vm429 = vcmp.lt.s32.totalorder %v426, %v417
    %v430 = vsel %vm429, %v426, %v417
    %vm431 = vcmp.lt.s32.totalorder %v428, %v419
    %v432 = vsel %vm431, %v428, %v419
    %vm433 = vcmp.lt.s32.totalorder %v430, %v421
    %v434 = vsel %vm433, %v430, %v421
    %vm435 = vcmp.lt.s32.totalorder %v432, %v434
    %v436 = vsel %vm435, %v432, %v434
    %v437 = vrot.slane %v436, 4
    %vm438 = vcmp.lt.s32.totalorder %v436, %v437
    %v439 = vsel %vm438, %v436, %v437
    %v440 = vrot.slane %v439, 2
    %vm441 = vcmp.lt.s32.totalorder %v439, %v440
    %v442 = vsel %vm441, %v439, %v440
    %v443 = vrot.slane %v442, 1
    %vm444 = vcmp.lt.s32.totalorder %v442, %v443
    %v445 = vsel %vm444, %v442, %v443
    %vm446 = vcmp.lt.s32.totalorder %v408, %v412
    %v447 = vsel %vm446, %v408, %v412
    %vm448 = vcmp.lt.s32.totalorder %v410, %v414
    %v449 = vsel %vm448, %v410, %v414
    %vm450 = vcmp.lt.s32.totalorder %v447, %v416
    %v451 = vsel %vm450, %v447, %v416
    %vm452 = vcmp.lt.s32.totalorder %v449, %v418
    %v453 = vsel %vm452, %v449, %v418
    %vm454 = vcmp.lt.s32.totalorder %v451, %v420
    %v455 = vsel %vm454, %v451, %v420
    %vm456 = vcmp.lt.s32.totalorder %v453, %v422
    %v457 = vsel %vm456, %v453, %v422
    %vm458 = vcmp.lt.s32.totalorder %v455, %v457
    %v459 = vsel %vm458, %v455, %v457
    %v460 = vrot.slane %v459, 4
    %vm461 = vcmp.lt.s32.totalorder %v459, %v460
    %v462 = vsel %vm461, %v459, %v460
    %v463 = vrot.slane %v462, 2
    %vm464 = vcmp.lt.s32.totalorder %v462, %v463
    %v465 = vsel %vm464, %v462, %v463
    %v466 = vrot.slane %v465, 1
    %vm467 = vcmp.lt.s32.totalorder %v465, %v466
    %v468 = vsel %vm467, %v465, %v466
    %vm469 = vcmask 1040384
    %v470 = vsel %vm469, %v241, %v377
    %v471 = vsel %vm469, %v254, %v390
    %v474 = vcombine.low %v470, %v471
    %v476 = vunpack.c.l.s4 1983009808
    %v477 = vunpack.c.0.s8 %v476
    %v478 = vlaneseq
    %v479 = vshrl.u32 %v478, 7
    %v480 = vsub.s32 %v477, %v479
    %v481 = vrot.slane %v474, %v480
    %483 = vst [vmem:[#allocation2] sm:$0xf] %v481
    %v484 = vsel %vm469, %v309, %v445
    %v485 = vsel %vm469, %v332, %v468
    %v486 = vcombine.low %v484, %v485
    %v488 = vunpack.c.l.s4 1983009808
    %v489 = vunpack.c.0.s8 %v488
    %v490 = vlaneseq
    %v491 = vshrl.u32 %v490, 7
    %v492 = vsub.s32 %v489, %v491
    %v493 = vrot.slane %v486, %v492
    %494 = vst [vmem:[#allocation4] sm:$0xf] %v493
    // Predicated region
    $region14: #{tpu_custom_call.1} parent=1 // pred_check
      _
    $region15: #{tpu_custom_call.1} parent=1 // pred_check_branch
      %496 = sbr.rel (0) target = $region17
    $region16: #{tpu_custom_call.1} parent=1 // pred_region
      %s498 = ssub.s32 64, 64
      %499 = vsyncadd [#allocation3], %s498
      %s501 = sshll.u32 [#allocation2], 4
      %s502 = int_to_ptr.vmem [resolvable:$true] %s501
      %504 = dma.vmem_to_hbm [thread:$0]  %s502, 64, %s3, [#allocation3]
    $region17: #{tpu_custom_call.1} parent=1 // pred_fallthru
      _
    // Predicated region
    $region18: #{tpu_custom_call.1} parent=1 // pred_check
      _
    $region19: #{tpu_custom_call.1} parent=1 // pred_check_branch
      %506 = sbr.rel (0) target = $region21
    $region20: #{tpu_custom_call.1} parent=1 // pred_region
      %s508 = ssub.s32 64, 64
      %509 = vsyncadd [#allocation5], %s508
      %s511 = sshll.u32 [#allocation4], 4
      %s512 = int_to_ptr.vmem [resolvable:$true] %s511
      %514 = dma.vmem_to_hbm [thread:$0]  %s512, 64, %s4, [#allocation5]
    $region21: #{tpu_custom_call.1} parent=1 // pred_fallthru
      _
    // Predicated region
    $region22: #{tpu_custom_call.1} parent=1 // pred_check
      _
    $region23: #{tpu_custom_call.1} parent=1 // pred_check_branch
      %516 = sbr.rel (0) target = $region25
    $region24: #{tpu_custom_call.1} parent=1 // pred_region
      %517 = dma.done [#allocation3], 64
    $region25: #{tpu_custom_call.1} parent=1 // pred_fallthru
      _
    // Predicated region
    $region26: #{tpu_custom_call.1} parent=1 // pred_check
      _
    $region27: #{tpu_custom_call.1} parent=1 // pred_check_branch
      %519 = sbr.rel (0) target = $region29
    $region28: #{tpu_custom_call.1} parent=1 // pred_region
      %520 = dma.done [#allocation5], 64
    $region29: #{tpu_custom_call.1} parent=1 // pred_fallthru
      _
    %521 = vsyncpa [#allocation3], 1
    %522 = vsyncpa [#allocation5], 1

</llo_original>
